<compile_context>
chip_gen: v5e
topology: v5e:2x2
jax: 0.10.0
libtpu: 0.0.40
codegen_flags: <defaults>
</compile_context>

<pallas_src>
import functools

import jax
import jax.numpy as jnp
from jax.experimental import pallas as pl
from jax.experimental.pallas import tpu as pltpu

BN_EPS = 1e-5


def _fold_bn(conv_bias, gamma, beta, mean, var):
    scale = gamma / jnp.sqrt(var + BN_EPS)
    shift = beta - mean * scale + conv_bias * scale
    # (C, 1): channel on sublanes, broadcast along the lane (spatial) axis.
    return scale.reshape(-1, 1), shift.reshape(-1, 1)


# ------------------------- fused Bottleneck kernel ---------------------------
def _bottleneck_kernel(x_ref, m_ref, w1p_ref, w2_ref, w34p_ref, o_ref,
                       col_ref, cat_ref, *, Cin, Cw, W):
    x = x_ref[...]                                   # (Cin, L)  lanes = imgs*HW
    L = x.shape[1]

    # ---- conv1: 1x1 (BN scale folded into weights) + shift + ReLU ----
    w1 = w1p_ref[:, :Cin]
    sh1 = w1p_ref[:, Cin:Cin + 1]
    sh2 = w1p_ref[:, Cin + 1:Cin + 2]
    h1 = jnp.maximum(
        jnp.dot(w1, x, preferred_element_type=jnp.float32) + sh1, 0.0)  # (Cw, L)

    # ---- conv2: 3x3 pad=1 via im2col ----
    # 9 lane rolls (XLU) * precomputed boundary masks (VPU) staged into a VMEM
    # scratch slab, then ONE K=9*Cw MXU matmul.
    tap = 0
    for dy in (-1, 0, 1):
        for dx in (-1, 0, 1):
            delta = dy * W + dx
            if delta:
                shifted = pltpu.roll(h1, (-delta) % L, 1) * m_ref[tap]
            else:
                shifted = h1                         # center tap: no shift/mask
            col_ref[tap * Cw:(tap + 1) * Cw, :] = shifted
            tap += 1
    h2 = jnp.maximum(
        jnp.dot(w2_ref[...], col_ref[...],
                preferred_element_type=jnp.float32) + sh2, 0.0)          # (Cw, L)

    # ---- conv3 + downsample fused: [w3|wd] @ [h2; x] + (sh3+shd), ReLU ----
    cat_ref[:Cw, :] = h2
    cat_ref[Cw:, :] = x
    w34 = w34p_ref[:, :Cw + Cin]
    sh34 = w34p_ref[:, Cw + Cin:Cw + Cin + 1]
    o_ref[...] = jnp.maximum(
        jnp.dot(w34, cat_ref[...], preferred_element_type=jnp.float32) + sh34,
        0.0)                                                             # (Cc, L)


def bottleneck_forward(x_nchw, p):
    N, Cin, H, W = x_nchw.shape
    HW = H * W
    Cw = p['w1'].shape[1]
    Cc = p['w3'].shape[1]

    # Fold batch into the lane axis: (N, Cin, H, W) -> (Cin, N*HW), img-major.
    xf = jnp.transpose(x_nchw.reshape(N, Cin, HW), (1, 0, 2)).reshape(Cin, N * HW)

    # Grid: 2 batch-chunks when possible (one per v7x TensorCore); on 1-TC
    # chips the extra grid step is one cheap serial iteration.
    G = 2 if (N >= 2 and N % 2 == 0) else 1
    ipc = N // G                     # images per chunk
    L = ipc * HW                     # lanes per chunk (multiple of 128)

    # Eval-mode BN folded to per-channel scale/shift; scales into the weights.
    s1, sh1 = _fold_bn(p['b1'], *p['bn1'])
    s2, sh2 = _fold_bn(p['b2'], *p['bn2'])
    s3, sh3 = _fold_bn(p['b3'], *p['bn3'])
    sd, shd = _fold_bn(p['bd'], *p['bnd'])

    # Packed weight inputs (5 DMAs total instead of 13 tiny ones).
    w1p = jnp.concatenate([p['w1'].T * s1, sh1, sh2], axis=1)        # (Cw, Cin+2)
    # (ky,kx,cin,cout) -> (cout, ky, kx, cin) -> (Cw, 9*Cw); row-scale by s2.
    w2f = jnp.transpose(p['w2'], (3, 0, 1, 2)).reshape(Cw, 9 * Cw) * s2
    w34p = jnp.concatenate([p['w3'].T * s3, p['wd'].T * sd, sh3 + shd],
                           axis=1)                                   # (Cc, Cw+Cin+1)

    # Precomputed 3x3 boundary masks (per image, tiled across the chunk's
    # images) — one multiply per tap in the kernel, no iota/compares.
    pos = jnp.arange(HW)
    row, col = pos // W, pos % W
    masks = []
    for dy in (-1, 0, 1):
        for dx in (-1, 0, 1):
            valid = ((row + dy >= 0) & (row + dy < H) &
                     (col + dx >= 0) & (col + dx < W))
            masks.append(valid.astype(jnp.float32))
    mask9 = jnp.tile(jnp.stack(masks).reshape(9, 1, HW), (1, 1, ipc))  # (9,1,L)

    kernel = functools.partial(_bottleneck_kernel, Cin=Cin, Cw=Cw, W=W)
    const2 = lambda g: (0, 0)

    out = pl.pallas_call(
        kernel,
        out_shape=jax.ShapeDtypeStruct((Cc, N * HW), jnp.float32),
        grid_spec=pltpu.PrefetchScalarGridSpec(
            num_scalar_prefetch=0,
            grid=(G,),
            in_specs=[
                pl.BlockSpec((Cin, L), lambda g: (0, g)),       # x batch-chunk
                pl.BlockSpec((9, 1, L), lambda g: (0, 0, 0)),   # boundary masks
                pl.BlockSpec((Cw, Cin + 2), const2),            # [w1*s1|sh1|sh2]
                pl.BlockSpec((Cw, 9 * Cw), const2),             # im2col weights*s2
                pl.BlockSpec((Cc, Cw + Cin + 1), const2),       # [w3*s3|wd*sd|sh3+shd]
            ],
            out_specs=pl.BlockSpec((Cc, L), lambda g: (0, g)),
            scratch_shapes=[
                pltpu.VMEM((9 * Cw, L), jnp.float32),           # im2col slab
                pltpu.VMEM((Cw + Cin, L), jnp.float32),         # [h2; x] slab
            ]),
        compiler_params=pltpu.CompilerParams(
            dimension_semantics=("parallel",)),
    )(xf, mask9, w1p, w2f, w34p)

    # (Cc, N*HW) -> (N, Cc, H, W)
    return jnp.transpose(out.reshape(Cc, N, HW), (1, 0, 2)).reshape(N, Cc, H, W)


# ------------------------------ parameters ----------------------------------
def init_params(key, in_channels):
    width = in_channels          # groups == 1 path
    change = 4 * in_channels
    ks = jax.random.split(key, 12)

    def randw(k, shape):
        return 0.1 * jax.random.normal(k, shape, jnp.float32)

    def bn(k, c):
        k1, k2, k3, k4 = jax.random.split(k, 4)
        gamma = 1.0 + 0.1 * jax.random.normal(k1, (c,), jnp.float32)
        beta = 0.1 * jax.random.normal(k2, (c,), jnp.float32)
        mean = 0.1 * jax.random.normal(k3, (c,), jnp.float32)
        var = jnp.abs(jax.random.normal(k4, (c,), jnp.float32)) + 0.5
        return gamma, beta, mean, var

    return dict(
        w1=randw(ks[0], (in_channels, width)), b1=randw(ks[1], (width,)),
        bn1=bn(ks[2], width),
        w2=randw(ks[3], (3, 3, width, width)), b2=randw(ks[4], (width,)),
        bn2=bn(ks[5], width),
        w3=randw(ks[6], (width, change)), b3=randw(ks[7], (change,)),
        bn3=bn(ks[8], change),
        wd=randw(ks[9], (in_channels, change)), bd=randw(ks[10], (change,)),
        bnd=bn(ks[11], change),
    )


# --------------------------- pure-JAX reference ------------------------------
def reference_forward(x_nchw, p):
    def bn_apply(y, bnp):
        gamma, beta, mean, var = bnp
        r = lambda a: a.reshape(1, -1, 1, 1)
        return (y - r(mean)) / jnp.sqrt(r(var) + BN_EPS) * r(gamma) + r(beta)

    def conv1x1(x, w, b):
        return jnp.einsum('nchw,cd->ndhw', x, w) + b.reshape(1, -1, 1, 1)

    def conv3x3(x, w, b):
        wk = jnp.transpose(w, (3, 2, 0, 1))          # HWIO -> OIHW
        y = jax.lax.conv_general_dilated(
            x, wk, (1, 1), ((1, 1), (1, 1)),
            dimension_numbers=('NCHW', 'OIHW', 'NCHW'))
        return y + b.reshape(1, -1, 1, 1)

    h1 = jax.nn.relu(bn_apply(conv1x1(x_nchw, p['w1'], p['b1']), p['bn1']))
    h2 = jax.nn.relu(bn_apply(conv3x3(h1, p['w2'], p['b2']), p['bn2']))
    h3 = bn_apply(conv1x1(h2, p['w3'], p['b3']), p['bn3'])
    idn = bn_apply(conv1x1(x_nchw, p['wd'], p['bd']), p['bnd'])
    return jax.nn.relu(h3 + idn)


if __name__ == "__main__":
    key = jax.random.PRNGKey(0)
    kx, kp = jax.random.split(key)

    N, C, H, W = 2, 4, 16, 16
    x = jax.random.normal(kx, (N, C, H, W), jnp.float32)   # NCHW, like PyTorch
    params = init_params(kp, C)

    out = jax.block_until_ready(bottleneck_forward(x, params))
    ref = jax.block_until_ready(reference_forward(x, params))

    assert out.shape == (N, 4 * C, H, W)
    assert jnp.allclose(out, ref, rtol=3e-3, atol=3e-3), \
        f"max abs diff {jnp.max(jnp.abs(out - ref))}"

    print("KERNEL_OK")
</pallas_src>

<mosaic_0001>
module attributes {stable_mosaic.version = 11 : i64} {
  func.func @_bottleneck_kernel(%arg0: i32, %arg1: memref<4x256xf32, #tpu.memory_space<vmem>>, %arg2: memref<9x1x256xf32, #tpu.memory_space<vmem>>, %arg3: memref<4x6xf32, #tpu.memory_space<vmem>>, %arg4: memref<4x36xf32, #tpu.memory_space<vmem>>, %arg5: memref<16x9xf32, #tpu.memory_space<vmem>>, %arg6: memref<16x256xf32, #tpu.memory_space<vmem>>, %arg7: memref<36x256xf32, #tpu.memory_space<vmem>>, %arg8: memref<8x256xf32, #tpu.memory_space<vmem>>) attributes {dimension_semantics = [#tpu.dimension_semantics<parallel>], iteration_bounds = array<i64: 2>, scalar_prefetch = 0 : i64, scratch_operands = 2 : i64, tpu.core_type = #tpu.core_type<tc>, window_params = [{transform_indices = @transform_0, window_bounds = array<i64: 4, 256>}, {pipeline_mode = #tpu.pipeline_mode<synchronous>, transform_indices = @transform_1, window_bounds = array<i64: 9, 1, 256>}, {pipeline_mode = #tpu.pipeline_mode<synchronous>, transform_indices = @transform_2, window_bounds = array<i64: 4, 6>}, {pipeline_mode = #tpu.pipeline_mode<synchronous>, transform_indices = @transform_3, window_bounds = array<i64: 4, 36>}, {pipeline_mode = #tpu.pipeline_mode<synchronous>, transform_indices = @transform_4, window_bounds = array<i64: 16, 9>}, {transform_indices = @transform_5, window_bounds = array<i64: 16, 256>}]} {
    %c0 = arith.constant 0 : index
    %c0_0 = arith.constant 0 : index
    %0 = vector.load %arg1[%c0, %c0_0] : memref<4x256xf32, #tpu.memory_space<vmem>>, vector<4x256xf32>
    %c0_1 = arith.constant 0 : index
    %c0_2 = arith.constant 0 : index
    %1 = vector.load %arg3[%c0_1, %c0_2] : memref<4x6xf32, #tpu.memory_space<vmem>>, vector<4x4xf32>
    %c0_3 = arith.constant 0 : index
    %c4 = arith.constant 4 : index
    %2 = vector.load %arg3[%c0_3, %c4] : memref<4x6xf32, #tpu.memory_space<vmem>>, vector<4x1xf32>
    %c0_4 = arith.constant 0 : index
    %c5 = arith.constant 5 : index
    %3 = vector.load %arg3[%c0_4, %c5] : memref<4x6xf32, #tpu.memory_space<vmem>>, vector<4x1xf32>
    %cst = arith.constant dense<0.000000e+00> : vector<4x256xf32>
    %4 = tpu.matmul %1, %0, %cst {dimension_numbers = #tpu.dot_dimension_numbers<[1], [0], [0], [1], [0, 0, 1, 1], [], []>} : vector<4x4xf32>, vector<4x256xf32>, vector<4x256xf32> -> vector<4x256xf32>
    %5 = vector.broadcast %2 : vector<4x1xf32> to vector<4x256xf32>
    %6 = arith.addf %4, %5 : vector<4x256xf32>
    %cst_5 = arith.constant 0.000000e+00 : f32
    %7 = vector.broadcast %cst_5 : f32 to vector<4x256xf32>
    %8 = arith.maximumf %6, %7 : vector<4x256xf32>
    %c17_i32 = arith.constant 17 : i32
    %9 = tpu.dynamic_rotate %8 by %c17_i32 dim 1 : vector<4x256xf32>, i32 -> vector<4x256xf32>
    %c0_6 = arith.constant 0 : index
    %c0_7 = arith.constant 0 : index
    %c0_8 = arith.constant 0 : index
    %10 = vector.load %arg2[%c0_6, %c0_7, %c0_8] : memref<9x1x256xf32, #tpu.memory_space<vmem>>, vector<1x1x256xf32>
    %11 = vector.shape_cast %10 : vector<1x1x256xf32> to vector<1x256xf32>
    %12 = vector.broadcast %11 : vector<1x256xf32> to vector<4x256xf32>
    %13 = arith.mulf %9, %12 : vector<4x256xf32>
    %c0_9 = arith.constant 0 : index
    %c0_10 = arith.constant 0 : index
    %14 = vector.load %arg7[%c0_9, %c0_10] : memref<36x256xf32, #tpu.memory_space<vmem>>, vector<4x256xf32>
    tpu.vector_store %arg7[%c0_9, %c0_10], %13 {strides = array<i32>} : memref<36x256xf32, #tpu.memory_space<vmem>>, vector<4x256xf32>,
    %c16_i32 = arith.constant 16 : i32
    %15 = tpu.dynamic_rotate %8 by %c16_i32 dim 1 : vector<4x256xf32>, i32 -> vector<4x256xf32>
    %c1 = arith.constant 1 : index
    %c0_11 = arith.constant 0 : index
    %c0_12 = arith.constant 0 : index
    %16 = vector.load %arg2[%c1, %c0_11, %c0_12] : memref<9x1x256xf32, #tpu.memory_space<vmem>>, vector<1x1x256xf32>
    %17 = vector.shape_cast %16 : vector<1x1x256xf32> to vector<1x256xf32>
    %18 = vector.broadcast %17 : vector<1x256xf32> to vector<4x256xf32>
    %19 = arith.mulf %15, %18 : vector<4x256xf32>
    %c4_13 = arith.constant 4 : index
    %c0_14 = arith.constant 0 : index
    %20 = vector.load %arg7[%c4_13, %c0_14] : memref<36x256xf32, #tpu.memory_space<vmem>>, vector<4x256xf32>
    tpu.vector_store %arg7[%c4_13, %c0_14], %19 {strides = array<i32>} : memref<36x256xf32, #tpu.memory_space<vmem>>, vector<4x256xf32>,
    %c15_i32 = arith.constant 15 : i32
    %21 = tpu.dynamic_rotate %8 by %c15_i32 dim 1 : vector<4x256xf32>, i32 -> vector<4x256xf32>
    %c2 = arith.constant 2 : index
    %c0_15 = arith.constant 0 : index
    %c0_16 = arith.constant 0 : index
    %22 = vector.load %arg2[%c2, %c0_15, %c0_16] : memref<9x1x256xf32, #tpu.memory_space<vmem>>, vector<1x1x256xf32>
    %23 = vector.shape_cast %22 : vector<1x1x256xf32> to vector<1x256xf32>
    %24 = vector.broadcast %23 : vector<1x256xf32> to vector<4x256xf32>
    %25 = arith.mulf %21, %24 : vector<4x256xf32>
    %c8 = arith.constant 8 : index
    %c0_17 = arith.constant 0 : index
    %26 = vector.load %arg7[%c8, %c0_17] : memref<36x256xf32, #tpu.memory_space<vmem>>, vector<4x256xf32>
    tpu.vector_store %arg7[%c8, %c0_17], %25 {strides = array<i32>} : memref<36x256xf32, #tpu.memory_space<vmem>>, vector<4x256xf32>,
    %c1_i32 = arith.constant 1 : i32
    %27 = tpu.dynamic_rotate %8 by %c1_i32 dim 1 : vector<4x256xf32>, i32 -> vector<4x256xf32>
    %c3 = arith.constant 3 : index
    %c0_18 = arith.constant 0 : index
    %c0_19 = arith.constant 0 : index
    %28 = vector.load %arg2[%c3, %c0_18, %c0_19] : memref<9x1x256xf32, #tpu.memory_space<vmem>>, vector<1x1x256xf32>
    %29 = vector.shape_cast %28 : vector<1x1x256xf32> to vector<1x256xf32>
    %30 = vector.broadcast %29 : vector<1x256xf32> to vector<4x256xf32>
    %31 = arith.mulf %27, %30 : vector<4x256xf32>
    %c12 = arith.constant 12 : index
    %c0_20 = arith.constant 0 : index
    %32 = vector.load %arg7[%c12, %c0_20] : memref<36x256xf32, #tpu.memory_space<vmem>>, vector<4x256xf32>
    tpu.vector_store %arg7[%c12, %c0_20], %31 {strides = array<i32>} : memref<36x256xf32, #tpu.memory_space<vmem>>, vector<4x256xf32>,
    %c16 = arith.constant 16 : index
    %c0_21 = arith.constant 0 : index
    %33 = vector.load %arg7[%c16, %c0_21] : memref<36x256xf32, #tpu.memory_space<vmem>>, vector<4x256xf32>
    tpu.vector_store %arg7[%c16, %c0_21], %8 {strides = array<i32>} : memref<36x256xf32, #tpu.memory_space<vmem>>, vector<4x256xf32>,
    %c255_i32 = arith.constant 255 : i32
    %34 = tpu.dynamic_rotate %8 by %c255_i32 dim 1 : vector<4x256xf32>, i32 -> vector<4x256xf32>
    %c5_22 = arith.constant 5 : index
    %c0_23 = arith.constant 0 : index
    %c0_24 = arith.constant 0 : index
    %35 = vector.load %arg2[%c5_22, %c0_23, %c0_24] : memref<9x1x256xf32, #tpu.memory_space<vmem>>, vector<1x1x256xf32>
    %36 = vector.shape_cast %35 : vector<1x1x256xf32> to vector<1x256xf32>
    %37 = vector.broadcast %36 : vector<1x256xf32> to vector<4x256xf32>
    %38 = arith.mulf %34, %37 : vector<4x256xf32>
    %c20 = arith.constant 20 : index
    %c0_25 = arith.constant 0 : index
    %39 = vector.load %arg7[%c20, %c0_25] : memref<36x256xf32, #tpu.memory_space<vmem>>, vector<4x256xf32>
    tpu.vector_store %arg7[%c20, %c0_25], %38 {strides = array<i32>} : memref<36x256xf32, #tpu.memory_space<vmem>>, vector<4x256xf32>,
    %c241_i32 = arith.constant 241 : i32
    %40 = tpu.dynamic_rotate %8 by %c241_i32 dim 1 : vector<4x256xf32>, i32 -> vector<4x256xf32>
    %c6 = arith.constant 6 : index
    %c0_26 = arith.constant 0 : index
    %c0_27 = arith.constant 0 : index
    %41 = vector.load %arg2[%c6, %c0_26, %c0_27] : memref<9x1x256xf32, #tpu.memory_space<vmem>>, vector<1x1x256xf32>
    %42 = vector.shape_cast %41 : vector<1x1x256xf32> to vector<1x256xf32>
    %43 = vector.broadcast %42 : vector<1x256xf32> to vector<4x256xf32>
    %44 = arith.mulf %40, %43 : vector<4x256xf32>
    %c24 = arith.constant 24 : index
    %c0_28 = arith.constant 0 : index
    %45 = vector.load %arg7[%c24, %c0_28] : memref<36x256xf32, #tpu.memory_space<vmem>>, vector<4x256xf32>
    tpu.vector_store %arg7[%c24, %c0_28], %44 {strides = array<i32>} : memref<36x256xf32, #tpu.memory_space<vmem>>, vector<4x256xf32>,
    %c240_i32 = arith.constant 240 : i32
    %46 = tpu.dynamic_rotate %8 by %c240_i32 dim 1 : vector<4x256xf32>, i32 -> vector<4x256xf32>
    %c7 = arith.constant 7 : index
    %c0_29 = arith.constant 0 : index
    %c0_30 = arith.constant 0 : index
    %47 = vector.load %arg2[%c7, %c0_29, %c0_30] : memref<9x1x256xf32, #tpu.memory_space<vmem>>, vector<1x1x256xf32>
    %48 = vector.shape_cast %47 : vector<1x1x256xf32> to vector<1x256xf32>
    %49 = vector.broadcast %48 : vector<1x256xf32> to vector<4x256xf32>
    %50 = arith.mulf %46, %49 : vector<4x256xf32>
    %c28 = arith.constant 28 : index
    %c0_31 = arith.constant 0 : index
    %51 = vector.load %arg7[%c28, %c0_31] : memref<36x256xf32, #tpu.memory_space<vmem>>, vector<4x256xf32>
    tpu.vector_store %arg7[%c28, %c0_31], %50 {strides = array<i32>} : memref<36x256xf32, #tpu.memory_space<vmem>>, vector<4x256xf32>,
    %c239_i32 = arith.constant 239 : i32
    %52 = tpu.dynamic_rotate %8 by %c239_i32 dim 1 : vector<4x256xf32>, i32 -> vector<4x256xf32>
    %c8_32 = arith.constant 8 : index
    %c0_33 = arith.constant 0 : index
    %c0_34 = arith.constant 0 : index
    %53 = vector.load %arg2[%c8_32, %c0_33, %c0_34] : memref<9x1x256xf32, #tpu.memory_space<vmem>>, vector<1x1x256xf32>
    %54 = vector.shape_cast %53 : vector<1x1x256xf32> to vector<1x256xf32>
    %55 = vector.broadcast %54 : vector<1x256xf32> to vector<4x256xf32>
    %56 = arith.mulf %52, %55 : vector<4x256xf32>
    %c32 = arith.constant 32 : index
    %c0_35 = arith.constant 0 : index
    %57 = vector.load %arg7[%c32, %c0_35] : memref<36x256xf32, #tpu.memory_space<vmem>>, vector<4x256xf32>
    tpu.vector_store %arg7[%c32, %c0_35], %56 {strides = array<i32>} : memref<36x256xf32, #tpu.memory_space<vmem>>, vector<4x256xf32>,
    %c0_36 = arith.constant 0 : index
    %c0_37 = arith.constant 0 : index
    %58 = vector.load %arg4[%c0_36, %c0_37] : memref<4x36xf32, #tpu.memory_space<vmem>>, vector<4x36xf32>
    %c0_38 = arith.constant 0 : index
    %c0_39 = arith.constant 0 : index
    %59 = vector.load %arg7[%c0_38, %c0_39] : memref<36x256xf32, #tpu.memory_space<vmem>>, vector<36x256xf32>
    %cst_40 = arith.constant dense<0.000000e+00> : vector<4x256xf32>
    %60 = tpu.matmul %58, %59, %cst_40 {dimension_numbers = #tpu.dot_dimension_numbers<[1], [0], [0], [1], [0, 0, 1, 1], [], []>} : vector<4x36xf32>, vector<36x256xf32>, vector<4x256xf32> -> vector<4x256xf32>
    %61 = vector.broadcast %3 : vector<4x1xf32> to vector<4x256xf32>
    %62 = arith.addf %60, %61 : vector<4x256xf32>
    %cst_41 = arith.constant 0.000000e+00 : f32
    %63 = vector.broadcast %cst_41 : f32 to vector<4x256xf32>
    %64 = arith.maximumf %62, %63 : vector<4x256xf32>
    %c0_42 = arith.constant 0 : index
    %c0_43 = arith.constant 0 : index
    %65 = vector.load %arg8[%c0_42, %c0_43] : memref<8x256xf32, #tpu.memory_space<vmem>>, vector<4x256xf32>
    tpu.vector_store %arg8[%c0_42, %c0_43], %64 {strides = array<i32>} : memref<8x256xf32, #tpu.memory_space<vmem>>, vector<4x256xf32>,
    %c4_44 = arith.constant 4 : index
    %c0_45 = arith.constant 0 : index
    %66 = vector.load %arg8[%c4_44, %c0_45] : memref<8x256xf32, #tpu.memory_space<vmem>>, vector<4x256xf32>
    tpu.vector_store %arg8[%c4_44, %c0_45], %0 {strides = array<i32>} : memref<8x256xf32, #tpu.memory_space<vmem>>, vector<4x256xf32>,
    %c0_46 = arith.constant 0 : index
    %c0_47 = arith.constant 0 : index
    %67 = vector.load %arg5[%c0_46, %c0_47] : memref<16x9xf32, #tpu.memory_space<vmem>>, vector<16x8xf32>
    %c0_48 = arith.constant 0 : index
    %c8_49 = arith.constant 8 : index
    %68 = vector.load %arg5[%c0_48, %c8_49] : memref<16x9xf32, #tpu.memory_space<vmem>>, vector<16x1xf32>
    %c0_50 = arith.constant 0 : index
    %c0_51 = arith.constant 0 : index
    %69 = vector.load %arg8[%c0_50, %c0_51] : memref<8x256xf32, #tpu.memory_space<vmem>>, vector<8x256xf32>
    %cst_52 = arith.constant dense<0.000000e+00> : vector<16x256xf32>
    %70 = tpu.matmul %67, %69, %cst_52 {dimension_numbers = #tpu.dot_dimension_numbers<[1], [0], [0], [1], [0, 0, 1, 1], [], []>} : vector<16x8xf32>, vector<8x256xf32>, vector<16x256xf32> -> vector<16x256xf32>
    %71 = vector.broadcast %68 : vector<16x1xf32> to vector<16x256xf32>
    %72 = arith.addf %70, %71 : vector<16x256xf32>
    %cst_53 = arith.constant 0.000000e+00 : f32
    %73 = vector.broadcast %cst_53 : f32 to vector<16x256xf32>
    %74 = arith.maximumf %72, %73 : vector<16x256xf32>
    %c0_54 = arith.constant 0 : index
    %c0_55 = arith.constant 0 : index
    %75 = vector.load %arg6[%c0_54, %c0_55] : memref<16x256xf32, #tpu.memory_space<vmem>>, vector<16x256xf32>
    tpu.vector_store %arg6[%c0_54, %c0_55], %74 {strides = array<i32>} : memref<16x256xf32, #tpu.memory_space<vmem>>, vector<16x256xf32>,
    return
  }
  func.func @transform_0(%arg0: i32) -> (i32, i32) {
    %c0_i32 = arith.constant 0 : i32
    %c0_i32_0 = arith.constant 0 : i32
    return %c0_i32, %arg0 : i32, i32
  }
  func.func @transform_1(%arg0: i32) -> (i32, i32, i32) {
    %c0_i32 = arith.constant 0 : i32
    %c0_i32_0 = arith.constant 0 : i32
    %c0_i32_1 = arith.constant 0 : i32
    %c0_i32_2 = arith.constant 0 : i32
    return %c0_i32, %c0_i32_0, %c0_i32_1 : i32, i32, i32
  }
  func.func @transform_2(%arg0: i32) -> (i32, i32) {
    %c0_i32 = arith.constant 0 : i32
    %c0_i32_0 = arith.constant 0 : i32
    %c0_i32_1 = arith.constant 0 : i32
    return %c0_i32, %c0_i32_0 : i32, i32
  }
  func.func @transform_3(%arg0: i32) -> (i32, i32) {
    %c0_i32 = arith.constant 0 : i32
    %c0_i32_0 = arith.constant 0 : i32
    %c0_i32_1 = arith.constant 0 : i32
    return %c0_i32, %c0_i32_0 : i32, i32
  }
  func.func @transform_4(%arg0: i32) -> (i32, i32) {
    %c0_i32 = arith.constant 0 : i32
    %c0_i32_0 = arith.constant 0 : i32
    %c0_i32_1 = arith.constant 0 : i32
    return %c0_i32, %c0_i32_0 : i32, i32
  }
  func.func @transform_5(%arg0: i32) -> (i32, i32) {
    %c0_i32 = arith.constant 0 : i32
    %c0_i32_0 = arith.constant 0 : i32
    return %c0_i32, %arg0 : i32, i32
  }
}

</mosaic_0001>

<llo_original>
// kernel: tpu_custom_call.1
$region0: #{tpu_custom_call.1}
  #allocation0 [shape = 'u32[]', space=smem, size = 0x4, offset = 0x4, fixed_abs, tag = 'smem constant byte address 0x4 - core index']
  #allocation1 [shape = 'u32[72,128]{1,0:T(1,128)}', space=vmem, size = 0x9000, scoped, tag = 'internal scratch']
  #allocation2 [shape = 'f32[36,256]{1,0:T(8,128)}', space=vmem, size = 0xa000, scoped, tag = 'scratch operand']
  #allocation3 [shape = 'f32[8,256]{1,0:T(8,128)}', space=vmem, size = 0x2000, scoped, tag = 'scratch operand']
  %s0 = inlined_call_operand.hbm [shape: f32[4,512], index: 0, kind: input, shape index: {}]
  %s1 = inlined_call_operand.hbm [shape: f32[9,1,256], index: 1, kind: input, shape index: {}]
  %s2 = inlined_call_operand.hbm [shape: f32[4,6], index: 2, kind: input, shape index: {}]
  %s3 = inlined_call_operand.hbm [shape: f32[4,36], index: 3, kind: input, shape index: {}]
  %s4 = inlined_call_operand.hbm [shape: f32[16,9], index: 4, kind: input, shape index: {}]
  %s5 = inlined_call_operand.hbm [shape: f32[16,512], index: 5, kind: output, shape index: {}]
  %s6 = sld [smem:[#allocation0]]
  $region73: #{tpu_custom_call.1} parent=0
    _
  %s8 = ssub.s32 1, %s6
  %s9 = scalar_select 0, %s8, %s6
  $region1: #{tpu_custom_call.1} parent=0
    #allocation4 [shape = 'u8[8192]{0}', space=vmem, size = 0x2000, scoped, tag = 'input window, operand 0']
    #allocation5 [shape = 's32[2]{0}', space=sflag, size = 0x8, scoped, tag = 'scoped memory for tpu_custom_call.1']
    #allocation6 [shape = 's32[2]{0}', space=sflag, size = 0x8, scoped, tag = 'scoped memory for tpu_custom_call.1']
    #allocation7 [shape = 'u8[9216]{0}', space=vmem, size = 0x2400, scoped, tag = 'input window, operand 1, single buffered']
    #allocation8 [shape = 's32[1]{0}', space=sflag, size = 0x4, scoped, tag = 'scoped memory for tpu_custom_call.1']
    #allocation9 [shape = 'u8[2048]{0}', space=vmem, size = 0x800, scoped, tag = 'input window, operand 2, single buffered']
    #allocation10 [shape = 'u8[2048]{0}', space=vmem, size = 0x800, scoped, tag = 'input window, operand 3, single buffered']
    #allocation11 [shape = 's32[1]{0}', space=sflag, size = 0x4, scoped, tag = 'scoped memory for tpu_custom_call.1']
    #allocation12 [shape = 'u8[8192]{0}', space=vmem, size = 0x2000, scoped, tag = 'input window, operand 4, single buffered']
    #allocation13 [shape = 'u8[32768]{0}', space=vmem, size = 0x8000, scoped, tag = 'output window, operand 0']
    %10 = vsyncpa [#allocation5], 0
    %s11 = scalar_lea.sflag [#allocation5], 1
    %12 = vsyncpa %s11, 0
    %13 = vsyncpa [#allocation8], 0
    %14 = vsyncpa [#allocation11], 0
    %15 = vsyncpa [#allocation6], 0
    %s16 = scalar_lea.sflag [#allocation6], 1
    %17 = vsyncpa %s16, 0
    loop: start=0, step=1, limit=4
    $region2: #{tpu_custom_call.1} parent=1 // loop_pre_header
      _
    $region3: #{tpu_custom_call.1} parent=1 // loop_header
      %s19 = sphi 0, %s23
      %p20 = scmp.ge.s32.totalorder %s19, 4
      %s29 = sphi 0, %s31
      %s32 = sphi 0, %s29
      %s33 = sphi 0, %s32
      %s49 = sphi 0, %s33
      %s53 = sphi 0, %s53
      %s55 = sphi 0, %s53
      %s56 = sphi 0, %s55
      %s70 = sphi 0, %s56
      %s74 = sphi 0, %s74
      %s76 = sphi 0, %s74
      %s77 = sphi 0, %s76
      %s91 = sphi 0, %s77
      %s95 = sphi 0, %s95
      %s97 = sphi 0, %s95
      %s98 = sphi 0, %s97
      %s112 = sphi 0, %s98
      %s116 = sphi 0, %s116
      %s118 = sphi 0, %s116
      %s119 = sphi 0, %s118
      %s133 = sphi 0, %s119
      %s139 = sphi 0, %s141
      %s142 = sphi 0, %s139
      %s143 = sphi 0, %s142
      %s159 = sphi 0, %s143
    $region4: #{tpu_custom_call.1} parent=1 // loop_header_branch
      %22 = sbr.rel (%p20) target = $region8
    $region5: #{tpu_custom_call.1} parent=1 // loop_body
      %s24 = ssub.s32 %s19, 1
      %s25 = ssub.s32 %s19, 2
      %s26 = sadd.s32 %s19, 1
      %s27 = ssub.s32 %s19, %s26
      %p28 = scmp.eq.s32.totalorder %s27, 0
      %s30 = sadd.s32 %s29, 1
      %s31 = scalar_select %p28, %s29, %s30
      %p34 = pneg %p28
      %p35 = scmp.eq.s32.totalorder %s19, 1
      %p36 = por %p34, %p35
      %p37 = scmp.ne.s32.totalorder %s29, %s32
      %p38 = scmp.eq.s32.totalorder %s19, 0
      %p39 = por %p37, %p38
      %p40 = scmp.ne.s32.totalorder %s29, %s32
      %p41 = scmp.eq.s32.totalorder %s24, 1
      %p42 = por %p40, %p41
      %p43 = scmp.ne.s32.totalorder %s32, %s33
      %p44 = scmp.eq.s32.totalorder %s24, 0
      %p45 = por %p43, %p44
      %p46 = scmp.ne.s32.totalorder %s32, %s33
      %p47 = scmp.eq.s32.totalorder %s25, 1
      %p48 = por %p46, %p47
      %p50 = scmp.ne.s32.totalorder %s33, %s49
      %p51 = scmp.eq.s32.totalorder %s25, 0
      %p52 = por %p50, %p51
      %s54 = sadd.s32 %s53, 1
      %p57 = scmp.eq.s32.totalorder %s19, 1
      %p58 = scmp.ne.s32.totalorder %s53, %s55
      %p59 = scmp.eq.s32.totalorder %s19, 0
      %p60 = por %p58, %p59
      %p61 = scmp.ne.s32.totalorder %s53, %s55
      %p62 = scmp.eq.s32.totalorder %s24, 1
      %p63 = por %p61, %p62
      %p64 = scmp.ne.s32.totalorder %s55, %s56
      %p65 = scmp.eq.s32.totalorder %s24, 0
      %p66 = por %p64, %p65
      %p67 = scmp.ne.s32.totalorder %s55, %s56
      %p68 = scmp.eq.s32.totalorder %s25, 1
      %p69 = por %p67, %p68
      %p71 = scmp.ne.s32.totalorder %s56, %s70
      %p72 = scmp.eq.s32.totalorder %s25, 0
      %p73 = por %p71, %p72
      %s75 = sadd.s32 %s74, 1
      %p78 = scmp.eq.s32.totalorder %s19, 1
      %p79 = scmp.ne.s32.totalorder %s74, %s76
      %p80 = scmp.eq.s32.totalorder %s19, 0
      %p81 = por %p79, %p80
      %p82 = scmp.ne.s32.totalorder %s74, %s76
      %p83 = scmp.eq.s32.totalorder %s24, 1
      %p84 = por %p82, %p83
      %p85 = scmp.ne.s32.totalorder %s76, %s77
      %p86 = scmp.eq.s32.totalorder %s24, 0
      %p87 = por %p85, %p86
      %p88 = scmp.ne.s32.totalorder %s76, %s77
      %p89 = scmp.eq.s32.totalorder %s25, 1
      %p90 = por %p88, %p89
      %p92 = scmp.ne.s32.totalorder %s77, %s91
      %p93 = scmp.eq.s32.totalorder %s25, 0
      %p94 = por %p92, %p93
      %s96 = sadd.s32 %s95, 1
      %p99 = scmp.eq.s32.totalorder %s19, 1
      %p100 = scmp.ne.s32.totalorder %s95, %s97
      %p101 = scmp.eq.s32.totalorder %s19, 0
      %p102 = por %p100, %p101
      %p103 = scmp.ne.s32.totalorder %s95, %s97
      %p104 = scmp.eq.s32.totalorder %s24, 1
      %p105 = por %p103, %p104
      %p106 = scmp.ne.s32.totalorder %s97, %s98
      %p107 = scmp.eq.s32.totalorder %s24, 0
      %p108 = por %p106, %p107
      %p109 = scmp.ne.s32.totalorder %s97, %s98
      %p110 = scmp.eq.s32.totalorder %s25, 1
      %p111 = por %p109, %p110
      %p113 = scmp.ne.s32.totalorder %s98, %s112
      %p114 = scmp.eq.s32.totalorder %s25, 0
      %p115 = por %p113, %p114
      %s117 = sadd.s32 %s116, 1
      %p120 = scmp.eq.s32.totalorder %s19, 1
      %p121 = scmp.ne.s32.totalorder %s116, %s118
      %p122 = scmp.eq.s32.totalorder %s19, 0
      %p123 = por %p121, %p122
      %p124 = scmp.ne.s32.totalorder %s116, %s118
      %p125 = scmp.eq.s32.totalorder %s24, 1
      %p126 = por %p124, %p125
      %p127 = scmp.ne.s32.totalorder %s118, %s119
      %p128 = scmp.eq.s32.totalorder %s24, 0
      %p129 = por %p127, %p128
      %p130 = scmp.ne.s32.totalorder %s118, %s119
      %p131 = scmp.eq.s32.totalorder %s25, 1
      %p132 = por %p130, %p131
      %p134 = scmp.ne.s32.totalorder %s119, %s133
      %p135 = scmp.eq.s32.totalorder %s25, 0
      %p136 = por %p134, %p135
      %s137 = ssub.s32 %s19, %s26
      %p138 = scmp.eq.s32.totalorder %s137, 0
      %s140 = sadd.s32 %s139, 1
      %s141 = scalar_select %p138, %s139, %s140
      %p144 = pneg %p138
      %p145 = scmp.eq.s32.totalorder %s19, 1
      %p146 = por %p144, %p145
      %p147 = scmp.ne.s32.totalorder %s139, %s142
      %p148 = scmp.eq.s32.totalorder %s19, 0
      %p149 = por %p147, %p148
      %p150 = scmp.ne.s32.totalorder %s139, %s142
      %p151 = scmp.eq.s32.totalorder %s24, 1
      %p152 = por %p150, %p151
      %p153 = scmp.ne.s32.totalorder %s142, %s143
      %p154 = scmp.eq.s32.totalorder %s24, 0
      %p155 = por %p153, %p154
      %p156 = scmp.ne.s32.totalorder %s142, %s143
      %p157 = scmp.eq.s32.totalorder %s25, 1
      %p158 = por %p156, %p157
      %p160 = scmp.ne.s32.totalorder %s143, %s159
      %p161 = scmp.eq.s32.totalorder %s25, 0
      %p162 = por %p160, %p161
      %p163 = scmp.le.s32.totalorder 1, %s19
      %p164 = scmp.lt.s32.totalorder %s19, 3
      %p165 = pnand %p163, %p164
      %p166 = pneg %p165
      // Predicated region
      $region9: #{tpu_custom_call.1} parent=5 // pred_check
        _
      $region10: #{tpu_custom_call.1} parent=5 // pred_check_branch
        %168 = sbr.rel (%p165) target = $region12
      $region11: #{tpu_custom_call.1} parent=5 // pred_region
        %s169 = ssub.s32 %s19, 1
        // Predicated region
        $region13: #{tpu_custom_call.1} parent=11 // pred_check
          %p170 = pneg %p66
        $region14: #{tpu_custom_call.1} parent=11 // pred_check_branch
          %172 = sbr.rel (%p170) target = $region16
        $region15: #{tpu_custom_call.1} parent=11 // pred_region
          %174 = vsyncadd [#allocation8], 0
          %s175 = sshll.u32 %s1, 4
          %s176 = int_to_ptr.hbm [resolvable:$true] %s175
          %s177 = sshll.u32 [#allocation7], 4
          %s178 = int_to_ptr.vmem [resolvable:$true] %s177
          %183 = dma.hbm_to_vmem [thread:$0]  %s176, 288, %s178, [#allocation8], 32, 32, 2
        $region16: #{tpu_custom_call.1} parent=11 // pred_fallthru
          _
        // Predicated region
        $region17: #{tpu_custom_call.1} parent=11 // pred_check
          %p184 = pneg %p87
        $region18: #{tpu_custom_call.1} parent=11 // pred_check_branch
          %186 = sbr.rel (%p184) target = $region20
        $region19: #{tpu_custom_call.1} parent=11 // pred_region
          %188 = vsyncadd [#allocation8], 0
          %s190 = sshll.u32 %s2, 4
          %s191 = int_to_ptr.hbm [resolvable:$true] %s190
          %s192 = sshll.u32 [#allocation9], 4
          %s193 = int_to_ptr.vmem [resolvable:$true] %s192
          %195 = dma.hbm_to_vmem [thread:$0]  %s191, 64, %s193, [#allocation8]
        $region20: #{tpu_custom_call.1} parent=11 // pred_fallthru
          _
        // Predicated region
        $region21: #{tpu_custom_call.1} parent=11 // pred_check
          %p196 = pneg %p108
        $region22: #{tpu_custom_call.1} parent=11 // pred_check_branch
          %198 = sbr.rel (%p196) target = $region24
        $region23: #{tpu_custom_call.1} parent=11 // pred_region
          %200 = vsyncadd [#allocation11], 0
          %s202 = sshll.u32 %s3, 4
          %s203 = int_to_ptr.hbm [resolvable:$true] %s202
          %s204 = sshll.u32 [#allocation10], 4
          %s205 = int_to_ptr.vmem [resolvable:$true] %s204
          %207 = dma.hbm_to_vmem [thread:$0]  %s203, 64, %s205, [#allocation11]
        $region24: #{tpu_custom_call.1} parent=11 // pred_fallthru
          _
        // Predicated region
        $region25: #{tpu_custom_call.1} parent=11 // pred_check
          %p208 = pneg %p129
        $region26: #{tpu_custom_call.1} parent=11 // pred_check_branch
          %210 = sbr.rel (%p208) target = $region28
        $region27: #{tpu_custom_call.1} parent=11 // pred_region
          %212 = vsyncadd [#allocation11], 0
          %s213 = sshll.u32 %s4, 4
          %s214 = int_to_ptr.hbm [resolvable:$true] %s213
          %s215 = sshll.u32 [#allocation12], 4
          %s216 = int_to_ptr.vmem [resolvable:$true] %s215
          %221 = dma.hbm_to_vmem [thread:$0]  %s214, 256, %s216, [#allocation11], 128, 128, 8
        $region28: #{tpu_custom_call.1} parent=11 // pred_fallthru
          _
      $region12: #{tpu_custom_call.1} parent=5 // pred_fallthru
        _
      %p222 = scmp.lt.s32.totalorder %s19, 2
      // Predicated region
      $region29: #{tpu_custom_call.1} parent=5 // pred_check
        %p223 = pneg %p222
      $region30: #{tpu_custom_call.1} parent=5 // pred_check_branch
        %225 = sbr.rel (%p223) target = $region32
      $region31: #{tpu_custom_call.1} parent=5 // pred_region
        // Predicated region
        $region33: #{tpu_custom_call.1} parent=31 // pred_check
          %p226 = pneg %p39
        $region34: #{tpu_custom_call.1} parent=31 // pred_check_branch
          %228 = sbr.rel (%p226) target = $region36
        $region35: #{tpu_custom_call.1} parent=31 // pred_region
          %s229 = sand.u32 %s29, 1
          %s230 = scalar_lea.sflag [#allocation5], %s229
          %s231 = sand.u32 %s29, 1
          %s232 = smul.addr %s231, 8
          %s233 = scalar_lea.vmem [#allocation4], %s232
          %s234 = smul.u32 2, %s19
          %236 = vsyncadd %s230, 0
          %s237 = smul.addr %s234, 4
          %s238 = scalar_lea.hbm %s0, %s237
          %s240 = sshll.u32 %s238, 4
          %s241 = int_to_ptr.hbm [resolvable:$true] %s240
          %s242 = sshll.u32 %s233, 4
          %s243 = int_to_ptr.vmem [resolvable:$true] %s242
          %245 = dma.hbm_to_vmem [thread:$0]  %s241, 128, %s243, %s230
        $region36: #{tpu_custom_call.1} parent=31 // pred_fallthru
          _
      $region32: #{tpu_custom_call.1} parent=5 // pred_fallthru
        _
      %p246 = scmp.le.s32.totalorder 1, %s19
      %p247 = scmp.lt.s32.totalorder %s19, 3
      %p248 = pnand %p246, %p247
      %p249 = pneg %p248
      // Predicated region
      $region37: #{tpu_custom_call.1} parent=5 // pred_check
        _
      $region38: #{tpu_custom_call.1} parent=5 // pred_check_branch
        %251 = sbr.rel (%p248) target = $region40
      $region39: #{tpu_custom_call.1} parent=5 // pred_region
        %s252 = ssub.s32 %s19, 1
        %s253 = sand.u32 %s32, 1
        %s254 = scalar_lea.sflag [#allocation5], %s253
        %s255 = sand.u32 %s32, 1
        %s256 = smul.addr %s255, 8
        %s257 = scalar_lea.vmem [#allocation4], %s256
        // Predicated region
        $region41: #{tpu_custom_call.1} parent=39 // pred_check
          %p258 = pneg %p45
        $region42: #{tpu_custom_call.1} parent=39 // pred_check_branch
          %260 = sbr.rel (%p258) target = $region44
        $region43: #{tpu_custom_call.1} parent=39 // pred_region
          %262 = dma.done %s254, 128
        $region44: #{tpu_custom_call.1} parent=39 // pred_fallthru
          _
        // Predicated region
        $region45: #{tpu_custom_call.1} parent=39 // pred_check
          %p263 = pneg %p66
        $region46: #{tpu_custom_call.1} parent=39 // pred_check_branch
          %265 = sbr.rel (%p263) target = $region48
        $region47: #{tpu_custom_call.1} parent=39 // pred_region
          %267 = dma.done [#allocation8], 288
        $region48: #{tpu_custom_call.1} parent=39 // pred_fallthru
          _
        // Predicated region
        $region49: #{tpu_custom_call.1} parent=39 // pred_check
          %p268 = pneg %p87
        $region50: #{tpu_custom_call.1} parent=39 // pred_check_branch
          %270 = sbr.rel (%p268) target = $region52
        $region51: #{tpu_custom_call.1} parent=39 // pred_region
          %272 = dma.done [#allocation8], 64
        $region52: #{tpu_custom_call.1} parent=39 // pred_fallthru
          _
        // Predicated region
        $region53: #{tpu_custom_call.1} parent=39 // pred_check
          %p273 = pneg %p108
        $region54: #{tpu_custom_call.1} parent=39 // pred_check_branch
          %275 = sbr.rel (%p273) target = $region56
        $region55: #{tpu_custom_call.1} parent=39 // pred_region
          %277 = dma.done [#allocation11], 64
        $region56: #{tpu_custom_call.1} parent=39 // pred_fallthru
          _
        // Predicated region
        $region57: #{tpu_custom_call.1} parent=39 // pred_check
          %p278 = pneg %p129
        $region58: #{tpu_custom_call.1} parent=39 // pred_check_branch
          %280 = sbr.rel (%p278) target = $region60
        $region59: #{tpu_custom_call.1} parent=39 // pred_region
          %282 = dma.done [#allocation11], 256
        $region60: #{tpu_custom_call.1} parent=39 // pred_fallthru
          _
        %s283 = sand.u32 %s32, 1
        %s284 = scalar_lea.sflag [#allocation5], %s283
        %s285 = sand.u32 %s32, 1
        %s286 = smul.addr %s285, 8
        %s287 = scalar_lea.vmem [#allocation4], %s286
        %p288 = pneg %p45
        %p289 = pneg %p42
        %p290 = pneg %p66
        %p291 = pneg %p63
        %p292 = pneg %p87
        %p293 = pneg %p84
        %p294 = pneg %p108
        %p295 = pneg %p105
        %p296 = pneg %p129
        %p297 = pneg %p126
        %p298 = pneg %p155
        %p299 = pneg %p152
        %s300 = sand.u32 %s142, 1
        %s301 = scalar_lea.sflag [#allocation6], %s300
        %s302 = sand.u32 %s142, 1
        %s303 = smul.addr %s302, 32
        %s304 = scalar_lea.vmem [#allocation13], %s303
        %s305 = smul.u32 2, %s24
        %s306 = smul.u32 2, %s24
        %v307 = vld [vmem:[%s257] sm:$0xff]
        %v308 = vld [vmem:[#allocation9] sm:$0xf]
        %310 = vset.pattern.permute.xlu0 4
        %311 = vperm.xlu0 %310, %v308
        %v312 = vpop.permute.xlu0 %311
        %315 = vst [vmem:[#allocation1] ss:$2 sm:$0xff] %v307
        %v316 = vld.sshfl [vmem:[#allocation1] sm:$0xff pattern:$0x75316420]
        %v317 = vld.sshfl [vmem:[#allocation1 + $0x8] sm:$0xff pattern:$0x75316420]
        %vm318 = vcmask 31744
        %v319 = vsel %vm318, %v308, 0
        %vm321 = vcmask 1043456
        %v322 = vsel %vm321, %v316, 0
        %v324 = vsel %vm321, %v317, 0
        %326 = vmatpush.msra.mxu0 0.0
        %327 = vmatpush.msra.mxu0 0.0
        %328 = vmatpush.msra.mxu0 0.0
        %329 = vmatpush.msra.mxu0 0.0
        %330 = vmatpush.msra.mxu0 0.0
        %331 = vmatpush.msra.mxu0 0.0
        %332 = vmatpush.msra.mxu0 0.0
        %333 = vmatpush.msra.mxu0 0.0
        %334 = vmatpush.msra.mxu0 0.0
        %335 = vmatpush.msra.mxu0 0.0
        %336 = vmatpush.msra.mxu0 0.0
        %337 = vmatpush.msra.mxu0 0.0
        %338 = vmatpush.msra.mxu0 0.0
        %339 = vmatpush.msra.mxu0 0.0
        %340 = vmatpush.msra.mxu0 0.0
        %341 = vmatpush.msra.mxu0 %v322
        %342 = vmatmul.f32.gmra.mxu0 %v319
        %v343 = vpop.f32.mrf.mxu0
        %v344 = vadd.f32 %v312, %v343
        %345 = vdwg.mxu0
        %346 = vmatpush.msra.mxu0 0.0
        %347 = vmatpush.msra.mxu0 0.0
        %348 = vmatpush.msra.mxu0 0.0
        %349 = vmatpush.msra.mxu0 0.0
        %350 = vmatpush.msra.mxu0 0.0
        %351 = vmatpush.msra.mxu0 0.0
        %352 = vmatpush.msra.mxu0 0.0
        %353 = vmatpush.msra.mxu0 0.0
        %354 = vmatpush.msra.mxu0 0.0
        %355 = vmatpush.msra.mxu0 0.0
        %356 = vmatpush.msra.mxu0 0.0
        %357 = vmatpush.msra.mxu0 0.0
        %358 = vmatpush.msra.mxu0 0.0
        %359 = vmatpush.msra.mxu0 0.0
        %360 = vmatpush.msra.mxu0 0.0
        %361 = vmatpush.msra.mxu0 %v324
        %362 = vmatmul.f32.gmra.mxu0 %v319
        %v363 = vpop.f32.mrf.mxu0
        %v364 = vadd.f32 %v312, %v363
        %365 = vdwg.mxu0
        %v366 = vmax.f32 %v344, 0.0
        %v367 = vmax.f32 %v364, 0.0
        %368 = vrot.lane.b32.xlu0 %v366, 17
        %v369 = vpop.permute.xlu0 %368
        %370 = vrot.lane.b32.xlu0 %v367, 17
        %v371 = vpop.permute.xlu0 %370
        %v372 = vlaneseq
        %v373 = vand.u32 %v372, 127
        %vm374 = vcmp.lt.s32.totalorder %v373, 17
        %v375 = vsel %vm374, %v369, %v371
        %v376 = vsel %vm374, %v371, %v369
        %v377 = vld [vmem:[#allocation7] sm:$0x3]
        %v379 = vperm.slane %v377, 0
        %v380 = vperm.slane %v377, 1
        %v383 = vmul.f32 %v376, %v379
        %v384 = vmul.f32 %v375, %v380
        %385 = vst [vmem:[#allocation2] sm:$0xf] %v383
        %386 = vst [vmem:[#allocation2 + $0x8] sm:$0xf] %v384
        %387 = vrot.lane.b32.xlu0 %v366, 16
        %v388 = vpop.permute.xlu0 %387
        %389 = vrot.lane.b32.xlu0 %v367, 16
        %v390 = vpop.permute.xlu0 %389
        %vm391 = vcmp.lt.s32.totalorder %v373, 16
        %v392 = vsel %vm391, %v388, %v390
        %v393 = vsel %vm391, %v390, %v388
        %s394 = scalar_lea.vmem [#allocation7], 2
        %v395 = vld [vmem:[%s394] sm:$0x3]
        %v397 = vperm.slane %v395, 0
        %v398 = vperm.slane %v395, 1
        %v401 = vmul.f32 %v393, %v397
        %v402 = vmul.f32 %v392, %v398
        %v405 = vrot.slane %v401, 4
        %v406 = vrot.slane %v402, 4
        %409 = vst [vmem:[#allocation2] sm:$0xf0] %v405
        %410 = vst [vmem:[#allocation2 + $0x8] sm:$0xf0] %v406
        %411 = vrot.lane.b32.xlu0 %v366, 15
        %v412 = vpop.permute.xlu0 %411
        %413 = vrot.lane.b32.xlu0 %v367, 15
        %v414 = vpop.permute.xlu0 %413
        %vm415 = vcmp.lt.s32.totalorder %v373, 15
        %v416 = vsel %vm415, %v412, %v414
        %v417 = vsel %vm415, %v414, %v412
        %s418 = scalar_lea.vmem [#allocation7], 4
        %v419 = vld [vmem:[%s418] sm:$0x3]
        %v421 = vperm.slane %v419, 0
        %v422 = vperm.slane %v419, 1
        %v425 = vmul.f32 %v417, %v421
        %v426 = vmul.f32 %v416, %v422
        %427 = vst [vmem:[#allocation2 + $0x10] sm:$0xf] %v425
        %428 = vst [vmem:[#allocation2 + $0x18] sm:$0xf] %v426
        %429 = vrot.lane.b32.xlu0 %v366, 1
        %v430 = vpop.permute.xlu0 %429
        %431 = vrot.lane.b32.xlu0 %v367, 1
        %v432 = vpop.permute.xlu0 %431
        %vm433 = vcmp.lt.s32.totalorder %v373, 1
        %v434 = vsel %vm433, %v430, %v432
        %v435 = vsel %vm433, %v432, %v430
        %s436 = scalar_lea.vmem [#allocation7], 6
        %v437 = vld [vmem:[%s436] sm:$0x3]
        %v439 = vperm.slane %v437, 0
        %v440 = vperm.slane %v437, 1
        %v443 = vmul.f32 %v435, %v439
        %v444 = vmul.f32 %v434, %v440
        %v447 = vrot.slane %v443, 4
        %v448 = vrot.slane %v444, 4
        %451 = vst [vmem:[#allocation2 + $0x10] sm:$0xf0] %v447
        %452 = vst [vmem:[#allocation2 + $0x18] sm:$0xf0] %v448
        %453 = vst [vmem:[#allocation2 + $0x20] sm:$0xf] %v366
        %454 = vst [vmem:[#allocation2 + $0x28] sm:$0xf] %v367
        %455 = vrot.lane.b32.xlu0 %v366, 127
        %v456 = vpop.permute.xlu0 %455
        %457 = vrot.lane.b32.xlu0 %v367, 127
        %v458 = vpop.permute.xlu0 %457
        %vm459 = vcmp.lt.s32.totalorder %v373, 127
        %v460 = vsel %vm459, %v456, %v458
        %v461 = vsel %vm459, %v458, %v456
        %s462 = scalar_lea.vmem [#allocation7], 10
        %v463 = vld [vmem:[%s462] sm:$0x3]
        %v465 = vperm.slane %v463, 0
        %v466 = vperm.slane %v463, 1
        %v469 = vmul.f32 %v460, %v465
        %v470 = vmul.f32 %v461, %v466
        %v473 = vrot.slane %v469, 4
        %v474 = vrot.slane %v470, 4
        %477 = vst [vmem:[#allocation2 + $0x20] sm:$0xf0] %v473
        %478 = vst [vmem:[#allocation2 + $0x28] sm:$0xf0] %v474
        %479 = vrot.lane.b32.xlu0 %v366, 113
        %v480 = vpop.permute.xlu0 %479
        %481 = vrot.lane.b32.xlu0 %v367, 113
        %v482 = vpop.permute.xlu0 %481
        %vm483 = vcmp.lt.s32.totalorder %v373, 113
        %v484 = vsel %vm483, %v480, %v482
        %v485 = vsel %vm483, %v482, %v480
        %s486 = scalar_lea.vmem [#allocation7], 12
        %v487 = vld [vmem:[%s486] sm:$0x3]
        %v489 = vperm.slane %v487, 0
        %v490 = vperm.slane %v487, 1
        %v493 = vmul.f32 %v484, %v489
        %v494 = vmul.f32 %v485, %v490
        %495 = vst [vmem:[#allocation2 + $0x30] sm:$0xf] %v493
        %496 = vst [vmem:[#allocation2 + $0x38] sm:$0xf] %v494
        %497 = vrot.lane.b32.xlu0 %v366, 112
        %v498 = vpop.permute.xlu0 %497
        %499 = vrot.lane.b32.xlu0 %v367, 112
        %v500 = vpop.permute.xlu0 %499
        %vm501 = vcmp.lt.s32.totalorder %v373, 112
        %v502 = vsel %vm501, %v498, %v500
        %v503 = vsel %vm501, %v500, %v498
        %s504 = scalar_lea.vmem [#allocation7], 14
        %v505 = vld [vmem:[%s504] sm:$0x3]
        %v507 = vperm.slane %v505, 0
        %v508 = vperm.slane %v505, 1
        %v511 = vmul.f32 %v502, %v507
        %v512 = vmul.f32 %v503, %v508
        %v515 = vrot.slane %v511, 4
        %v516 = vrot.slane %v512, 4
        %519 = vst [vmem:[#allocation2 + $0x30] sm:$0xf0] %v515
        %520 = vst [vmem:[#allocation2 + $0x38] sm:$0xf0] %v516
        %521 = vrot.lane.b32.xlu0 %v366, 111
        %v522 = vpop.permute.xlu0 %521
        %523 = vrot.lane.b32.xlu0 %v367, 111
        %v524 = vpop.permute.xlu0 %523
        %vm525 = vcmp.lt.s32.totalorder %v373, 111
        %v526 = vsel %vm525, %v522, %v524
        %v527 = vsel %vm525, %v524, %v522
        %s528 = scalar_lea.vmem [#allocation7], 16
        %v529 = vld [vmem:[%s528] sm:$0x3]
        %v531 = vperm.slane %v529, 0
        %v532 = vperm.slane %v529, 1
        %v535 = vmul.f32 %v526, %v531
        %v536 = vmul.f32 %v527, %v532
        %537 = vst [vmem:[#allocation2 + $0x40] sm:$0xf] %v535
        %538 = vst [vmem:[#allocation2 + $0x48] sm:$0xf] %v536
        %v539 = vld [vmem:[#allocation10] sm:$0xf]
        %v540 = vld [vmem:[#allocation2] sm:$0xff]
        %v541 = vld [vmem:[#allocation2 + $0x8] sm:$0xff]
        %v542 = vld [vmem:[#allocation2 + $0x10] sm:$0xff]
        %v543 = vld [vmem:[#allocation2 + $0x18] sm:$0xff]
        %v544 = vld [vmem:[#allocation2 + $0x20] sm:$0xff]
        %v545 = vld [vmem:[#allocation2 + $0x28] sm:$0xff]
        %v546 = vld [vmem:[#allocation2 + $0x30] sm:$0xff]
        %v547 = vld [vmem:[#allocation2 + $0x38] sm:$0xff]
        %v548 = vld [vmem:[#allocation2 + $0x40] sm:$0xf]
        %v549 = vld [vmem:[#allocation2 + $0x48] sm:$0xf]
        %550 = vset.pattern.permute.xlu0 5
        %551 = vperm.xlu0 %550, %v308
        %v552 = vpop.permute.xlu0 %551
        %vm554 = vcmask 293888
        %v556 = vsel %vm554, %v539, 0
        %v559 = vsel %vm321, %v548, 0
        %v562 = vsel %vm321, %v549, 0
        %564 = vmatpush.msra.mxu0 0.0
        %565 = vmatpush.msra.mxu0 0.0
        %566 = vmatpush.msra.mxu0 0.0
        %567 = vmatpush.msra.mxu0 0.0
        %568 = vmatpush.msra.mxu0 0.0
        %569 = vmatpush.msra.mxu0 0.0
        %570 = vmatpush.msra.mxu0 0.0
        %571 = vmatpush.msra.mxu0 0.0
        %572 = vmatpush.msra.mxu0 0.0
        %573 = vmatpush.msra.mxu0 0.0
        %574 = vmatpush.msra.mxu0 0.0
        %575 = vmatpush.msra.mxu0 %v559
        %576 = vmatpush.msra.mxu0 %v546
        %577 = vmatpush.msra.mxu0 %v544
        %578 = vmatpush.msra.mxu0 %v542
        %579 = vmatpush.msra.mxu0 %v540
        %580 = vmatmul.f32.gmra.mxu0 %v556
        %v581 = vpop.f32.mrf.mxu0
        %v582 = vadd.f32 %v552, %v581
        %583 = vdwg.mxu0
        %584 = vmatpush.msra.mxu0 0.0
        %585 = vmatpush.msra.mxu0 0.0
        %586 = vmatpush.msra.mxu0 0.0
        %587 = vmatpush.msra.mxu0 0.0
        %588 = vmatpush.msra.mxu0 0.0
        %589 = vmatpush.msra.mxu0 0.0
        %590 = vmatpush.msra.mxu0 0.0
        %591 = vmatpush.msra.mxu0 0.0
        %592 = vmatpush.msra.mxu0 0.0
        %593 = vmatpush.msra.mxu0 0.0
        %594 = vmatpush.msra.mxu0 0.0
        %595 = vmatpush.msra.mxu0 %v562
        %596 = vmatpush.msra.mxu0 %v547
        %597 = vmatpush.msra.mxu0 %v545
        %598 = vmatpush.msra.mxu0 %v543
        %599 = vmatpush.msra.mxu0 %v541
        %600 = vmatmul.f32.gmra.mxu0 %v556
        %v601 = vpop.f32.mrf.mxu0
        %v602 = vadd.f32 %v552, %v601
        %603 = vdwg.mxu0
        %v604 = vmax.f32 %v582, 0.0
        %v605 = vmax.f32 %v602, 0.0
        %606 = vst [vmem:[#allocation3] sm:$0xf] %v604
        %607 = vst [vmem:[#allocation3 + $0x8] sm:$0xf] %v605
        %s608 = scalar_lea.vmem [#allocation1], 1
        %609 = vst [vmem:[%s608] ss:$2 sm:$0xff] %v307
        %v610 = vld.sshfl [vmem:[#allocation1] sm:$0xff pattern:$0x75316420]
        %v611 = vld.sshfl [vmem:[#allocation1 + $0x8] sm:$0xff pattern:$0x75316420]
        %614 = vst [vmem:[#allocation3] sm:$0xf0] %v610
        %615 = vst [vmem:[#allocation3 + $0x8] sm:$0xf0] %v611
        %v616 = vld [vmem:[#allocation12] sm:$0xff]
        %v617 = vld [vmem:[#allocation12 + $0x8] sm:$0xff]
        %v618 = vld [vmem:[#allocation3] sm:$0xff]
        %v619 = vld [vmem:[#allocation3 + $0x8] sm:$0xff]
        %621 = vset.pattern.permute.xlu0 8
        %622 = vperm.xlu0 %621, %v616
        %v623 = vpop.permute.xlu0 %622
        %626 = vset.pattern.permute.xlu0 8
        %627 = vperm.xlu0 %626, %v617
        %v628 = vpop.permute.xlu0 %627
        %vm630 = vcmask 64512
        %v631 = vsel %vm630, %v616, 0
        %v633 = vsel %vm630, %v617, 0
        %635 = vmatpush.msra.mxu0 0.0
        %636 = vmatpush.msra.mxu0 0.0
        %637 = vmatpush.msra.mxu0 0.0
        %638 = vmatpush.msra.mxu0 0.0
        %639 = vmatpush.msra.mxu0 0.0
        %640 = vmatpush.msra.mxu0 0.0
        %641 = vmatpush.msra.mxu0 0.0
        %642 = vmatpush.msra.mxu0 0.0
        %643 = vmatpush.msra.mxu0 0.0
        %644 = vmatpush.msra.mxu0 0.0
        %645 = vmatpush.msra.mxu0 0.0
        %646 = vmatpush.msra.mxu0 0.0
        %647 = vmatpush.msra.mxu0 0.0
        %648 = vmatpush.msra.mxu0 0.0
        %649 = vmatpush.msra.mxu0 0.0
        %650 = vmatpush.msra.mxu0 %v618
        %651 = vmatmul.f32.gmra.mxu0 %v631
        %v652 = vpop.f32.mrf.mxu0
        %v653 = vadd.f32 %v623, %v652
        %654 = vmatmul.f32.gmra.mxu0 %v633
        %v655 = vpop.f32.mrf.mxu0
        %v656 = vadd.f32 %v628, %v655
        %657 = vdwg.mxu0
        %658 = vmatpush.msra.mxu0 0.0
        %659 = vmatpush.msra.mxu0 0.0
        %660 = vmatpush.msra.mxu0 0.0
        %661 = vmatpush.msra.mxu0 0.0
        %662 = vmatpush.msra.mxu0 0.0
        %663 = vmatpush.msra.mxu0 0.0
        %664 = vmatpush.msra.mxu0 0.0
        %665 = vmatpush.msra.mxu0 0.0
        %666 = vmatpush.msra.mxu0 0.0
        %667 = vmatpush.msra.mxu0 0.0
        %668 = vmatpush.msra.mxu0 0.0
        %669 = vmatpush.msra.mxu0 0.0
        %670 = vmatpush.msra.mxu0 0.0
        %671 = vmatpush.msra.mxu0 0.0
        %672 = vmatpush.msra.mxu0 0.0
        %673 = vmatpush.msra.mxu0 %v619
        %674 = vmatmul.f32.gmra.mxu0 %v631
        %v675 = vpop.f32.mrf.mxu0
        %v676 = vadd.f32 %v623, %v675
        %677 = vmatmul.f32.gmra.mxu0 %v633
        %v678 = vpop.f32.mrf.mxu0
        %v679 = vadd.f32 %v628, %v678
        %680 = vdwg.mxu0
        %v681 = vmax.f32 %v653, 0.0
        %v682 = vmax.f32 %v676, 0.0
        %v683 = vmax.f32 %v656, 0.0
        %v684 = vmax.f32 %v679, 0.0
        %685 = vst [vmem:[%s304] sm:$0xff] %v681
        %686 = vst [vmem:[%s304 + $0x8] sm:$0xff] %v682
        %687 = vst [vmem:[%s304 + $0x10] sm:$0xff] %v683
        %688 = vst [vmem:[%s304 + $0x18] sm:$0xff] %v684
        %s689 = sand.u32 %s142, 1
        %s690 = scalar_lea.sflag [#allocation6], %s689
        %s691 = sand.u32 %s142, 1
        %s692 = smul.addr %s691, 32
        %s693 = scalar_lea.vmem [#allocation13], %s692
        // Predicated region
        $region61: #{tpu_custom_call.1} parent=39 // pred_check
          %p694 = pneg %p152
        $region62: #{tpu_custom_call.1} parent=39 // pred_check_branch
          %696 = sbr.rel (%p694) target = $region64
        $region63: #{tpu_custom_call.1} parent=39 // pred_region
          %s697 = smul.u32 2, %s24
          %699 = vsyncadd %s690, 0
          %s700 = smul.addr %s697, 8
          %s701 = scalar_lea.hbm %s5, %s700
          %s702 = sshll.u32 %s693, 4
          %s703 = int_to_ptr.vmem [resolvable:$true] %s702
          %s704 = sshll.u32 %s701, 4
          %s705 = int_to_ptr.hbm [resolvable:$true] %s704
          %710 = dma.vmem_to_hbm [thread:$0]  %s703, 512, %s705, %s690, 256, 512, 16
        $region64: #{tpu_custom_call.1} parent=39 // pred_fallthru
          _
      $region40: #{tpu_custom_call.1} parent=5 // pred_fallthru
        _
      %p711 = scmp.le.s32.totalorder 2, %s19
      // Predicated region
      $region65: #{tpu_custom_call.1} parent=5 // pred_check
        %p712 = pneg %p711
      $region66: #{tpu_custom_call.1} parent=5 // pred_check_branch
        %714 = sbr.rel (%p712) target = $region68
      $region67: #{tpu_custom_call.1} parent=5 // pred_region
        %s715 = ssub.s32 %s19, 2
        // Predicated region
        $region69: #{tpu_custom_call.1} parent=67 // pred_check
          %p716 = pneg %p158
        $region70: #{tpu_custom_call.1} parent=67 // pred_check_branch
          %718 = sbr.rel (%p716) target = $region72
        $region71: #{tpu_custom_call.1} parent=67 // pred_region
          %s719 = sand.u32 %s143, 1
          %s720 = scalar_lea.sflag [#allocation6], %s719
          %s721 = sand.u32 %s143, 1
          %s722 = smul.addr %s721, 32
          %s723 = scalar_lea.vmem [#allocation13], %s722
          %725 = dma.done %s720, 512
        $region72: #{tpu_custom_call.1} parent=67 // pred_fallthru
          _
      $region68: #{tpu_custom_call.1} parent=5 // pred_fallthru
        _
    $region6: #{tpu_custom_call.1} parent=1 // loop_footer
      %s23 = sadd.s32 1, %s19
    $region7: #{tpu_custom_call.1} parent=1 // loop_footer_branch
      %18 = sbr.rel target = $region3
    $region8: #{tpu_custom_call.1} parent=1 // loop_exit
      _
    %726 = vsyncpa [#allocation5], 1
    %s727 = scalar_lea.sflag [#allocation5], 1
    %728 = vsyncpa %s727, 1
    %729 = vsyncpa [#allocation8], 1
    %730 = vsyncpa [#allocation11], 1
    %731 = vsyncpa [#allocation6], 1
    %s732 = scalar_lea.sflag [#allocation6], 1
    %733 = vsyncpa %s732, 1

</llo_original>
